<compile_context>
chip_gen: v5e
topology: v5e:2x2
jax: 0.10.0
libtpu: 0.0.40
codegen_flags: <defaults>
</compile_context>

<pallas_src>
import math

import jax
import jax.numpy as jnp
from jax.experimental import pallas as pl
from jax.experimental.pallas import tpu as pltpu


def _add_pe_kernel(x_ref, pe_ref, o_ref):
    # x_ref / o_ref: (tB, tS, D) tile; pe_ref: (1, tS, D) shared tile,
    # broadcast over the leading (batch) axis.
    o_ref[...] = x_ref[...] + pe_ref[...]


# ---------------------------------------------------------------------------
# Tiling helpers
# ---------------------------------------------------------------------------

# ~2 MiB of x per block; with pe + out and 2x double-buffering this keeps the
# total VMEM footprint <= ~12 MiB, within default scoped limits on v5e/v6e/v7x.
_TARGET_BLOCK_BYTES = 2 << 20


def _sublane_pack(dtype) -> int:
    # 8 sublanes for 4-byte types, 16 for 2-byte (bf16), 32 for 1-byte.
    return max(8, 32 // jnp.dtype(dtype).itemsize)


def _pick_seq_tile(S: int, D: int, itemsize: int, pack: int) -> int:
    """Largest divisor of S that is a multiple of `pack` and fits the budget.

    Falls back to the full extent S (always a legal block) if no such divisor
    exists, matching the behaviour of a full-array block.
    """
    max_rows = max(pack, _TARGET_BLOCK_BYTES // max(1, D * itemsize))
    if S <= max_rows:
        return S
    best = None
    for t in range(pack, max_rows + 1, pack):
        if S % t == 0:
            best = t
    return best if best is not None else S


def _pick_batch_tile(B: int, tS: int, D: int, itemsize: int) -> int:
    """Fold as many batch rows per block as the budget allows (divisor of B)."""
    row_bytes = tS * D * itemsize
    max_b = max(1, _TARGET_BLOCK_BYTES // max(1, row_bytes))
    best = 1
    for t in range(1, min(B, max_b) + 1):
        if B % t == 0:
            best = t
    return best


# ---------------------------------------------------------------------------
# pe table construction (parameter glue, plain JAX)
# ---------------------------------------------------------------------------

def make_positional_encoding(seq_len: int, d_model: int, dtype=jnp.float32):
    """Builds pe exactly like the PyTorch forward (deterministic, no RNG)."""
    position = jnp.arange(seq_len, dtype=jnp.float32)[:, None]            # (S, 1)
    div_term = jnp.exp(
        jnp.arange(0, d_model, 2, dtype=jnp.float32)
        * (-math.log(2.0 * seq_len) / d_model)
    )                                                                     # (ceil(D/2),)
    angles = position * div_term                                          # (S, ceil(D/2))
    pe = jnp.zeros((1, seq_len, d_model), dtype=jnp.float32)
    pe = pe.at[0, :, 0::2].set(jnp.sin(angles))
    # Guard odd d_model: the 1::2 slice has floor(D/2) columns.
    pe = pe.at[0, :, 1::2].set(jnp.cos(angles[:, : d_model // 2]))
    return pe.astype(dtype)


# ---------------------------------------------------------------------------
# Pallas forward
# ---------------------------------------------------------------------------

def add_positional_encoding(x: jax.Array, pe: jax.Array) -> jax.Array:
    """x: (B, S, D), pe: (1, S, D)  ->  (B, S, D) = x + broadcast(pe)."""
    B, S, D = x.shape
    assert pe.shape == (1, S, D), (pe.shape, x.shape)
    pe = pe.astype(x.dtype)

    itemsize = jnp.dtype(x.dtype).itemsize
    pack = _sublane_pack(x.dtype)
    tS = _pick_seq_tile(S, D, itemsize, pack)
    tB = _pick_batch_tile(B, tS, D, itemsize)
    n_s, n_b = S // tS, B // tB

    return pl.pallas_call(
        _add_pe_kernel,
        out_shape=jax.ShapeDtypeStruct((B, S, D), x.dtype),
        grid_spec=pltpu.PrefetchScalarGridSpec(
            num_scalar_prefetch=0,
            # s is the outer axis, b the inner one: pe's block index is
            # constant across the inner axis, so pe is fetched once per
            # s-tile instead of once per (b, s) step.
            grid=(n_s, n_b),
            in_specs=[
                pl.BlockSpec((tB, tS, D), lambda s, b: (b, s, 0)),  # x tile
                pl.BlockSpec((1, tS, D), lambda s, b: (0, s, 0)),   # shared pe
            ],
            out_specs=pl.BlockSpec((tB, tS, D), lambda s, b: (b, s, 0)),
        ),
        compiler_params=pltpu.CompilerParams(
            # Two independent parallel axes -> shards across v7x's 2 TCs.
            dimension_semantics=("parallel", "parallel"),
            # >= default scoped limit on all of v5e/v6e/v7x, <= physical.
            vmem_limit_bytes=32 * 1024 * 1024,
        ),
    )(x, pe)


def positional_encoding_forward(x: jax.Array) -> jax.Array:
    """Mirrors PositionalEncodingVariable.forward: rebuild pe from x's shape,
    then out = x + pe broadcast over the batch axis."""
    _, seq_len, d_model = x.shape  # module hard-codes d_model=256 == x.shape[-1]
    pe = make_positional_encoding(seq_len, d_model, dtype=x.dtype)
    return add_positional_encoding(x, pe)


def reference_forward(x, pe):
    return x + pe  # numpy-style broadcast over axis 0


if __name__ == "__main__":
    # Small shapes consistent with the module: forward hard-codes d_model=256,
    # seq_len is taken from x.shape[1]; batch is free.
    batch = 2
    seq_len = 8
    d_model = 256

    key = jax.random.PRNGKey(0)
    x = jax.random.normal(key, (batch, seq_len, d_model), dtype=jnp.float32)

    out = positional_encoding_forward(x)
    out = jax.block_until_ready(out)

    pe = make_positional_encoding(seq_len, d_model, dtype=jnp.float32)
    ref = reference_forward(x, pe)

    assert out.shape == x.shape
    assert jnp.allclose(out, ref, atol=1e-6, rtol=1e-6)

    print("KERNEL_OK")
</pallas_src>

<mosaic_0001>
module attributes {stable_mosaic.version = 11 : i64} {
  func.func @_add_pe_kernel(%arg0: i32, %arg1: i32, %arg2: memref<2x8x256xf32, #tpu.memory_space<vmem>>, %arg3: memref<1x8x256xf32, #tpu.memory_space<vmem>>, %arg4: memref<2x8x256xf32, #tpu.memory_space<vmem>>) attributes {dimension_semantics = [#tpu.dimension_semantics<parallel>, #tpu.dimension_semantics<parallel>], iteration_bounds = array<i64: 1, 1>, scalar_prefetch = 0 : i64, scratch_operands = 0 : i64, tpu.core_type = #tpu.core_type<tc>, window_params = [{transform_indices = @transform_0, window_bounds = array<i64: 2, 8, 256>}, {transform_indices = @transform_1, window_bounds = array<i64: 1, 8, 256>}, {transform_indices = @transform_2, window_bounds = array<i64: 2, 8, 256>}]} {
    %c0 = arith.constant 0 : index
    %c0_0 = arith.constant 0 : index
    %c0_1 = arith.constant 0 : index
    %0 = vector.load %arg2[%c0, %c0_0, %c0_1] : memref<2x8x256xf32, #tpu.memory_space<vmem>>, vector<2x8x256xf32>
    %c0_2 = arith.constant 0 : index
    %c0_3 = arith.constant 0 : index
    %c0_4 = arith.constant 0 : index
    %1 = vector.load %arg3[%c0_2, %c0_3, %c0_4] : memref<1x8x256xf32, #tpu.memory_space<vmem>>, vector<1x8x256xf32>
    %2 = vector.broadcast %1 : vector<1x8x256xf32> to vector<2x8x256xf32>
    %3 = arith.addf %0, %2 : vector<2x8x256xf32>
    %c0_5 = arith.constant 0 : index
    %c0_6 = arith.constant 0 : index
    %c0_7 = arith.constant 0 : index
    %4 = vector.load %arg4[%c0_5, %c0_6, %c0_7] : memref<2x8x256xf32, #tpu.memory_space<vmem>>, vector<2x8x256xf32>
    tpu.vector_store %arg4[%c0_5, %c0_6, %c0_7], %3 {strides = array<i32>} : memref<2x8x256xf32, #tpu.memory_space<vmem>>, vector<2x8x256xf32>,
    return
  }
  func.func @transform_0(%arg0: i32, %arg1: i32) -> (i32, i32, i32) {
    %c0_i32 = arith.constant 0 : i32
    %c0_i32_0 = arith.constant 0 : i32
    return %arg1, %arg0, %c0_i32 : i32, i32, i32
  }
  func.func @transform_1(%arg0: i32, %arg1: i32) -> (i32, i32, i32) {
    %c0_i32 = arith.constant 0 : i32
    %c0_i32_0 = arith.constant 0 : i32
    %c0_i32_1 = arith.constant 0 : i32
    return %c0_i32, %arg0, %c0_i32_0 : i32, i32, i32
  }
  func.func @transform_2(%arg0: i32, %arg1: i32) -> (i32, i32, i32) {
    %c0_i32 = arith.constant 0 : i32
    %c0_i32_0 = arith.constant 0 : i32
    return %arg1, %arg0, %c0_i32 : i32, i32, i32
  }
}

</mosaic_0001>

<llo_original>
// kernel: tpu_custom_call.1
$region0: #{tpu_custom_call.1}
  #allocation0 [shape = 'u32[]', space=smem, size = 0x4, offset = 0x4, fixed_abs, tag = 'smem constant byte address 0x4 - core index']
  #allocation1 [shape = 'u32[72,128]{1,0:T(1,128)}', space=vmem, size = 0x9000, scoped, tag = 'internal scratch']
  %s0 = inlined_call_operand.hbm [shape: f32[2,8,256], index: 0, kind: input, shape index: {}]
  %s1 = inlined_call_operand.hbm [shape: f32[1,8,256], index: 1, kind: input, shape index: {}]
  %s2 = inlined_call_operand.hbm [shape: f32[2,8,256], index: 2, kind: output, shape index: {}]
  %s3 = sld [smem:[#allocation0]]
  $region26: #{tpu_custom_call.1} parent=0
    _
  %s5 = ssub.s32 1, %s3
  %s6 = scalar_select 0, %s5, %s3
  $region1: #{tpu_custom_call.1} parent=0
    #allocation2 [shape = 'u8[16384]{0}', space=vmem, size = 0x4000, scoped, tag = 'input window, operand 0, single buffered']
    #allocation3 [shape = 's32[1]{0}', space=sflag, size = 0x4, scoped, tag = 'scoped memory for tpu_custom_call.1']
    #allocation4 [shape = 's32[1]{0}', space=sflag, size = 0x4, scoped, tag = 'scoped memory for tpu_custom_call.1']
    #allocation5 [shape = 'u8[8192]{0}', space=vmem, size = 0x2000, scoped, tag = 'input window, operand 1, single buffered']
    #allocation6 [shape = 's32[1]{0}', space=sflag, size = 0x4, scoped, tag = 'scoped memory for tpu_custom_call.1']
    #allocation7 [shape = 'u8[16384]{0}', space=vmem, size = 0x4000, scoped, tag = 'output window, operand 0, single buffered']
    %7 = vsyncpa [#allocation3], 0
    %8 = vsyncpa [#allocation6], 0
    %9 = vsyncpa [#allocation4], 0
    // Predicated region
    $region2: #{tpu_custom_call.1} parent=1 // pred_check
      _
    $region3: #{tpu_custom_call.1} parent=1 // pred_check_branch
      %11 = sbr.rel (0) target = $region5
    $region4: #{tpu_custom_call.1} parent=1 // pred_region
      %13 = vsyncadd [#allocation3], 0
      %s14 = sshll.u32 %s0, 4
      %s15 = int_to_ptr.hbm [resolvable:$true] %s14
      %s16 = sshll.u32 [#allocation2], 4
      %s17 = int_to_ptr.vmem [resolvable:$true] %s16
      %22 = dma.hbm_to_vmem [thread:$0]  %s15, 512, %s17, [#allocation3], 256, 256, 16
    $region5: #{tpu_custom_call.1} parent=1 // pred_fallthru
      _
    // Predicated region
    $region6: #{tpu_custom_call.1} parent=1 // pred_check
      _
    $region7: #{tpu_custom_call.1} parent=1 // pred_check_branch
      %24 = sbr.rel (0) target = $region9
    $region8: #{tpu_custom_call.1} parent=1 // pred_region
      %26 = vsyncadd [#allocation6], 0
      %s28 = sshll.u32 %s1, 4
      %s29 = int_to_ptr.hbm [resolvable:$true] %s28
      %s30 = sshll.u32 [#allocation5], 4
      %s31 = int_to_ptr.vmem [resolvable:$true] %s30
      %33 = dma.hbm_to_vmem [thread:$0]  %s29, 256, %s31, [#allocation6]
    $region9: #{tpu_custom_call.1} parent=1 // pred_fallthru
      _
    // Predicated region
    $region10: #{tpu_custom_call.1} parent=1 // pred_check
      _
    $region11: #{tpu_custom_call.1} parent=1 // pred_check_branch
      %35 = sbr.rel (0) target = $region13
    $region12: #{tpu_custom_call.1} parent=1 // pred_region
      %37 = dma.done [#allocation3], 512
    $region13: #{tpu_custom_call.1} parent=1 // pred_fallthru
      _
    // Predicated region
    $region14: #{tpu_custom_call.1} parent=1 // pred_check
      _
    $region15: #{tpu_custom_call.1} parent=1 // pred_check_branch
      %39 = sbr.rel (0) target = $region17
    $region16: #{tpu_custom_call.1} parent=1 // pred_region
      %41 = dma.done [#allocation6], 256
    $region17: #{tpu_custom_call.1} parent=1 // pred_fallthru
      _
    %v42 = vld [vmem:[#allocation2] sm:$0xff]
    %v43 = vld [vmem:[#allocation2 + $0x8] sm:$0xff]
    %v44 = vld [vmem:[#allocation2 + $0x10] sm:$0xff]
    %v45 = vld [vmem:[#allocation2 + $0x18] sm:$0xff]
    %v46 = vld [vmem:[#allocation5] sm:$0xff]
    %v47 = vld [vmem:[#allocation5 + $0x8] sm:$0xff]
    %v48 = vadd.f32 %v42, %v46
    %v49 = vadd.f32 %v43, %v47
    %v50 = vadd.f32 %v44, %v46
    %v51 = vadd.f32 %v45, %v47
    %52 = vst [vmem:[#allocation7] sm:$0xff] %v48
    %53 = vst [vmem:[#allocation7 + $0x8] sm:$0xff] %v49
    %54 = vst [vmem:[#allocation7 + $0x10] sm:$0xff] %v50
    %55 = vst [vmem:[#allocation7 + $0x18] sm:$0xff] %v51
    // Predicated region
    $region18: #{tpu_custom_call.1} parent=1 // pred_check
      _
    $region19: #{tpu_custom_call.1} parent=1 // pred_check_branch
      %57 = sbr.rel (0) target = $region21
    $region20: #{tpu_custom_call.1} parent=1 // pred_region
      %59 = vsyncadd [#allocation4], 0
      %s60 = sshll.u32 [#allocation7], 4
      %s61 = int_to_ptr.vmem [resolvable:$true] %s60
      %s62 = sshll.u32 %s2, 4
      %s63 = int_to_ptr.hbm [resolvable:$true] %s62
      %68 = dma.vmem_to_hbm [thread:$0]  %s61, 512, %s63, [#allocation4], 256, 256, 16
    $region21: #{tpu_custom_call.1} parent=1 // pred_fallthru
      _
    // Predicated region
    $region22: #{tpu_custom_call.1} parent=1 // pred_check
      _
    $region23: #{tpu_custom_call.1} parent=1 // pred_check_branch
      %70 = sbr.rel (0) target = $region25
    $region24: #{tpu_custom_call.1} parent=1 // pred_region
      %72 = dma.done [#allocation4], 512
    $region25: #{tpu_custom_call.1} parent=1 // pred_fallthru
      _
    %73 = vsyncpa [#allocation3], 1
    %74 = vsyncpa [#allocation6], 1
    %75 = vsyncpa [#allocation4], 1

</llo_original>
